<compile_context>
chip_gen: v7x
topology: tpu7x:2x2x1
jax: 0.10.0
libtpu: 0.0.40
codegen_flags: <defaults>
</compile_context>

<pallas_src>
import functools

import jax
import jax.numpy as jnp
from jax import lax
from jax.experimental import pallas as pl
from jax.experimental.pallas import tpu as pltpu

_VMEM_FALLBACK = 48 * 1024 * 1024
_VMEM_CACHE = None


def _vmem_limit_bytes():
    """Generation-aware VMEM budget: ~3/4 of physical, 48 MiB fallback."""
    global _VMEM_CACHE
    if _VMEM_CACHE is None:
        limit = _VMEM_FALLBACK
        try:
            info = pltpu.get_tpu_info()
            cap = getattr(info, "vmem_capacity_bytes", None)
            if cap:
                limit = int(cap) * 3 // 4   # ~96 MiB v5e/v6e, ~48 MiB v7x
        except Exception:
            pass
        _VMEM_CACHE = limit
    return _VMEM_CACHE


def _round_up(x, m):
    return ((x + m - 1) // m) * m


# ----------------------------------------------------------------------------
# Fused linear: out = [resid +] act( LN_or_scale(x) @ w [+ b] )
# ----------------------------------------------------------------------------
def _fused_linear_kernel(*refs, has_bias, has_resid, has_ln, activation,
                         pre_scale, eps, k_split):
    idx = 0
    x_ref = refs[idx]; idx += 1
    w_ref = refs[idx]; idx += 1
    b_ref = None
    if has_bias:
        b_ref = refs[idx]; idx += 1
    r_ref = None
    if has_resid:
        r_ref = refs[idx]; idx += 1
    g_ref = bb_ref = None
    if has_ln:
        g_ref = refs[idx]; idx += 1
        bb_ref = refs[idx]; idx += 1
    o_ref = refs[idx]; idx += 1
    acc_ref = refs[idx] if k_split else None

    x = x_ref[...]
    if pre_scale or has_ln:
        xf = x.astype(jnp.float32)
        if pre_scale:                     # fused "x*2 - 1" image scaling
            xf = xf * 2.0 - 1.0
        if has_ln:                        # fused LayerNorm over the full K row
            mu = jnp.mean(xf, axis=-1, keepdims=True)
            var = jnp.mean((xf - mu) ** 2, axis=-1, keepdims=True)
            xf = (xf - mu) * lax.rsqrt(var + eps)
            xf = (xf * g_ref[...].astype(jnp.float32)
                  + bb_ref[...].astype(jnp.float32))
        x = xf.astype(x_ref.dtype)        # back to bf16 for the MXU

    def epilogue(y):                      # f32 epilogue math
        if has_bias:
            y = y + b_ref[...].astype(jnp.float32)
        if activation == "quick_gelu":
            y = y * jax.nn.sigmoid(1.702 * y)
        if has_resid:
            y = y + r_ref[...].astype(jnp.float32)
        return y.astype(o_ref.dtype)

    if not k_split:
        # Fast path: no K grid axis -> no VMEM accumulator, no init/finalize.
        y = jnp.dot(x, w_ref[...], preferred_element_type=jnp.float32)
        o_ref[...] = epilogue(y)
    else:
        k = pl.program_id(1)
        nk = pl.num_programs(1)

        @pl.when(k == 0)
        def _():
            acc_ref[...] = jnp.zeros_like(acc_ref)

        acc_ref[...] += jnp.dot(x, w_ref[...],
                                preferred_element_type=jnp.float32)

        @pl.when(k == nk - 1)
        def _():
            o_ref[...] = epilogue(acc_ref[...])


def pallas_fused_linear(x, w, b=None, residual=None, ln_gamma=None,
                        ln_beta=None, activation=None, pre_scale=False,
                        eps=1e-5, tm_pref=256, tk_pref=512):
    M, K = x.shape
    Kw, N = w.shape
    assert K == Kw
    has_ln = ln_gamma is not None
    vmem_limit = _vmem_limit_bytes()

    # M tile: multiple of 16 (bf16 sublane packing) or the full dim.
    tm = M if M <= tm_pref else tm_pref

    # Resident-weight policy: keep the whole (K, N) weight in VMEM with a
    # constant index_map (fetched once per call) whenever it fits a fraction of
    # the per-generation VMEM budget; never split K when LN is fused (LN needs
    # the full row).  Every bf16 ViT-B weight takes the resident path.
    w_bytes = K * N * w.dtype.itemsize
    resident_budget = vmem_limit // 3
    tk = K
    if (not has_ln) and (w_bytes > resident_budget) and K > tk_pref:
        for cand in range(tk_pref, 127, -128):
            if K % cand == 0:
                tk = cand
                break
    k_split = tk != K

    if k_split:
        grid = (pl.cdiv(M, tm), K // tk)
        dims = ("parallel", "arbitrary")
        x_spec = pl.BlockSpec((tm, tk), lambda i, k: (i, k))
        # TODO(synk): if the streamed-weight DMA is exposed here, raise depth
        # with pipeline_mode=pl.Buffered(3) on this spec.
        w_spec = pl.BlockSpec((tk, N), lambda i, k: (k, 0))
        row = lambda nn: pl.BlockSpec((1, nn), lambda i, k: (0, 0))
        mn_spec = pl.BlockSpec((tm, N), lambda i, k: (i, 0))
        scratch = [pltpu.VMEM((tm, N), jnp.float32)]
    else:
        grid = (pl.cdiv(M, tm),)
        dims = ("parallel",)
        x_spec = pl.BlockSpec((tm, K), lambda i: (i, 0))
        w_spec = pl.BlockSpec((K, N), lambda i: (0, 0))   # resident weight
        row = lambda nn: pl.BlockSpec((1, nn), lambda i: (0, 0))
        mn_spec = pl.BlockSpec((tm, N), lambda i: (i, 0))
        scratch = []

    args = [x, w]
    in_specs = [x_spec, w_spec]
    if b is not None:
        args.append(b.reshape(1, N))
        in_specs.append(row(N))
    if residual is not None:
        args.append(residual)
        in_specs.append(mn_spec)
    if has_ln:
        args.append(ln_gamma.reshape(1, K))
        args.append(ln_beta.reshape(1, K))
        in_specs.append(row(K))
        in_specs.append(row(K))

    kernel = functools.partial(
        _fused_linear_kernel,
        has_bias=b is not None,
        has_resid=residual is not None,
        has_ln=has_ln,
        activation=activation,
        pre_scale=pre_scale,
        eps=eps,
        k_split=k_split,
    )
    return pl.pallas_call(
        kernel,
        grid=grid,
        in_specs=in_specs,
        out_specs=mn_spec,
        out_shape=jax.ShapeDtypeStruct((M, N), x.dtype),
        scratch_shapes=scratch,
        compiler_params=pltpu.CompilerParams(
            dimension_semantics=dims,
            vmem_limit_bytes=vmem_limit),
    )(*args)


# ----------------------------------------------------------------------------
# Embeddings epilogue: (token_emb + pos_emb) -> pre-LayerNorm, fused.
# ----------------------------------------------------------------------------
def _embed_ln_kernel(h_ref, pos_ref, g_ref, b_ref, o_ref, *, eps):
    x = h_ref[0].astype(jnp.float32) + pos_ref[...].astype(jnp.float32)
    mu = jnp.mean(x, axis=-1, keepdims=True)
    var = jnp.mean((x - mu) ** 2, axis=-1, keepdims=True)
    y = (x - mu) * lax.rsqrt(var + eps)
    y = y * g_ref[...].astype(jnp.float32) + b_ref[...].astype(jnp.float32)
    o_ref[0] = y.astype(o_ref.dtype)


def pallas_embed_ln(h, pos, g, b, eps=1e-5):
    """h: (B, S_pad, D); pos: (S_pad, D) -> LN(h + pos)."""
    B, S_pad, D = h.shape
    return pl.pallas_call(
        functools.partial(_embed_ln_kernel, eps=eps),
        grid=(B,),
        in_specs=[pl.BlockSpec((1, S_pad, D), lambda i: (i, 0, 0)),
                  pl.BlockSpec((S_pad, D), lambda i: (0, 0)),
                  pl.BlockSpec((1, D), lambda i: (0, 0)),
                  pl.BlockSpec((1, D), lambda i: (0, 0))],
        out_specs=pl.BlockSpec((1, S_pad, D), lambda i: (i, 0, 0)),
        out_shape=jax.ShapeDtypeStruct((B, S_pad, D), h.dtype),
        compiler_params=pltpu.CompilerParams(
            dimension_semantics=("parallel",),
            vmem_limit_bytes=_vmem_limit_bytes()),
    )(h, pos, g.reshape(1, D), b.reshape(1, D))


# ----------------------------------------------------------------------------
# Multi-head attention: one batch element per grid step; per-head q/k/v sliced
# straight off the qkv ref, per-head outputs written directly into o_ref column
# slices (no output list / lane concat); scores & softmax in f32, dots in bf16.
# ----------------------------------------------------------------------------
def _attn_kernel(qkv_ref, o_ref, *, num_heads, head_dim, scale, seq_len):
    s_pad = qkv_ref.shape[1]
    d_model = num_heads * head_dim

    # Static additive bias masking padded key positions (scores stay f32, so
    # -1e30 is safe).
    key_ids = lax.broadcasted_iota(jnp.int32, (1, s_pad), 1)
    key_bias = jnp.where(key_ids < seq_len, 0.0, -1e30).astype(jnp.float32)

    for h in range(num_heads):                  # unrolled; one head live at a time
        lo = h * head_dim
        q = qkv_ref[0, :, lo:lo + head_dim]                               # bf16
        k = qkv_ref[0, :, d_model + lo:d_model + lo + head_dim]          # bf16
        v = qkv_ref[0, :, 2 * d_model + lo:2 * d_model + lo + head_dim]  # bf16

        s = lax.dot_general(q, k, (((1,), (1,)), ((), ())),
                            preferred_element_type=jnp.float32)  # (S_pad,S_pad) f32
        s = s * scale + key_bias
        s = s - jnp.max(s, axis=-1, keepdims=True)
        p = jnp.exp(s)
        p = p * pl.reciprocal(jnp.sum(p, axis=-1, keepdims=True), approx=True)
        out = jnp.dot(p.astype(v.dtype), v, preferred_element_type=jnp.float32)
        o_ref[0, :, lo:lo + head_dim] = out.astype(o_ref.dtype)


def pallas_attention(qkv, num_heads, seq_len, scale):
    """qkv: (B, S_pad, 3*D) -> (B, S_pad, D) with heads merged."""
    B, S_pad, threeD = qkv.shape
    D = threeD // 3
    head_dim = D // num_heads
    return pl.pallas_call(
        functools.partial(_attn_kernel, num_heads=num_heads,
                          head_dim=head_dim, scale=scale, seq_len=seq_len),
        grid=(B,),
        in_specs=[pl.BlockSpec((1, S_pad, threeD), lambda b: (b, 0, 0))],
        out_specs=pl.BlockSpec((1, S_pad, D), lambda b: (b, 0, 0)),
        out_shape=jax.ShapeDtypeStruct((B, S_pad, D), qkv.dtype),
        compiler_params=pltpu.CompilerParams(
            dimension_semantics=("parallel",),
            vmem_limit_bytes=_vmem_limit_bytes()),
    )(qkv)


# ----------------------------------------------------------------------------
# Model glue (reshapes / parameter plumbing in plain JAX)
# ----------------------------------------------------------------------------
def extract_patches(x, P):
    """x: (B,C,H,W) NCHW -> (B*num_patches, C*P*P) channel-major per patch
    (matches nn.Conv2d weight flattening order)."""
    B, C, H, W = x.shape
    gh, gw = H // P, W // P
    x = x.reshape(B, C, gh, P, gw, P)
    x = x.transpose(0, 2, 4, 1, 3, 5)            # (B, gh, gw, C, P, P)
    return x.reshape(B * gh * gw, C * P * P)


def init_params(key, cfg):
    C, P, D, L, I, PD = cfg["C"], cfg["P"], cfg["D"], cfg["L"], cfg["I"], cfg["PD"]
    S = cfg["S"]
    std = 0.02
    keys = iter(jax.random.split(key, 8 + 6 * L))
    f32 = jnp.float32
    bf16 = jnp.bfloat16

    def nrm(shape, dtype=bf16):
        return (std * jax.random.normal(next(keys), shape)).astype(dtype)

    params = {
        "patch_w": nrm((C * P * P, D)),          # conv weight, flattened+transposed
        "class_emb": nrm((D,)),
        "pos_emb": nrm((S, D), f32),
        "pre_ln_g": jnp.ones((D,), f32), "pre_ln_b": jnp.zeros((D,), f32),
        "post_ln_g": jnp.ones((D,), f32), "post_ln_b": jnp.zeros((D,), f32),
        "proj_w": nrm((D, PD)),                  # visual_projection (no bias)
        "layers": [],
    }
    for _ in range(L):
        params["layers"].append({
            "ln1_g": jnp.ones((D,), f32), "ln1_b": jnp.zeros((D,), f32),
            "qkv_w": nrm((D, 3 * D)), "qkv_b": jnp.zeros((3 * D,), f32),
            "out_w": nrm((D, D)), "out_b": jnp.zeros((D,), f32),
            "ln2_g": jnp.ones((D,), f32), "ln2_b": jnp.zeros((D,), f32),
            "fc1_w": nrm((D, I)), "fc1_b": jnp.zeros((I,), f32),
            "fc2_w": nrm((I, D)), "fc2_b": jnp.zeros((D,), f32),
        })
    return params


def clip_feature_extractor(x, params, cfg):
    """x: (B, C, Hin, Win) NCHW float32 -> (B, projection_dim) features."""
    B, C = x.shape[0], x.shape[1]
    R, P, D, H = cfg["R"], cfg["P"], cfg["D"], cfg["H"]
    hd = D // H
    scale = hd ** -0.5

    # TODO(synk): jax.image.resize applies antialiasing when downsampling,
    # unlike F.interpolate(align_corners=False, antialias=False); exact for
    # upsampling (the case exercised here).
    x = jax.image.resize(x, (B, C, R, R), method="bilinear")

    # Patch embedding: (2x - 1) @ W_patch, scaling fused in-kernel; bf16 stream.
    patches = extract_patches(x, P).astype(jnp.bfloat16)         # (B*np, C*P*P)
    patch_emb = pallas_fused_linear(patches, params["patch_w"], pre_scale=True)
    num_patches = patch_emb.shape[0] // B
    patch_emb = patch_emb.reshape(B, num_patches, D)

    cls = jnp.broadcast_to(
        params["class_emb"].reshape(1, 1, D).astype(jnp.bfloat16), (B, 1, D))
    h = jnp.concatenate([cls, patch_emb], axis=1)
    S = h.shape[1]

    # Pad the token axis to a multiple of 16 (bf16 sublane packing); padded
    # keys are masked in attention and padded rows never mix into real rows.
    S_pad = _round_up(S, 16)
    if S_pad != S:
        h = jnp.pad(h, ((0, 0), (0, S_pad - S), (0, 0)))
    pos = jnp.pad(params["pos_emb"], ((0, S_pad - S), (0, 0)))

    # pos-emb add fused with the pre-LayerNorm (single kernel).
    h = pallas_embed_ln(h, pos, params["pre_ln_g"], params["pre_ln_b"])
    h2 = h.reshape(B * S_pad, D)

    for lp in params["layers"]:
        # --- self-attention block: LN1 fused into the QKV projection ---
        resid = h2
        qkv = pallas_fused_linear(h2, lp["qkv_w"], lp["qkv_b"],
                                  ln_gamma=lp["ln1_g"], ln_beta=lp["ln1_b"])
        attn = pallas_attention(qkv.reshape(B, S_pad, 3 * D), H, S, scale)
        h2 = pallas_fused_linear(attn.reshape(B * S_pad, D),
                                 lp["out_w"], lp["out_b"], residual=resid)

        # --- MLP block: LN2 + fc1 + quick-GELU fused, fc2 + residual fused ---
        resid = h2
        hn = pallas_fused_linear(h2, lp["fc1_w"], lp["fc1_b"],
                                 ln_gamma=lp["ln2_g"], ln_beta=lp["ln2_b"],
                                 activation="quick_gelu")
        h2 = pallas_fused_linear(hn, lp["fc2_w"], lp["fc2_b"], residual=resid)

    h = h2.reshape(B, S_pad, D)
    pooled = h[:, 0]                                             # CLS token
    # post-LayerNorm fused with the visual projection (no bias).
    feats = pallas_fused_linear(pooled, params["proj_w"],
                                ln_gamma=params["post_ln_g"],
                                ln_beta=params["post_ln_b"])
    return feats.astype(jnp.float32)


# ----------------------------------------------------------------------------
if __name__ == "__main__":
    # Small synthetic CLIP-ViT config (shapes scaled down from ViT-B/32).
    cfg = {
        "C": 3,      # input channels
        "R": 32,     # input_resolution (stand-in for 224)
        "P": 8,      # patch size (stand-in for 32)
        "D": 32,     # hidden size
        "H": 4,      # attention heads
        "L": 2,      # encoder layers
        "I": 64,     # MLP intermediate size
        "PD": 16,    # projection_dim (feature_dim)
    }
    cfg["S"] = (cfg["R"] // cfg["P"]) ** 2 + 1   # tokens = patches + CLS

    key = jax.random.PRNGKey(0)
    k_param, k_x = jax.random.split(key)
    params = init_params(k_param, cfg)

    # Input image batch (NCHW, values in [0, 1] like processor output).
    x = jax.random.uniform(k_x, (2, cfg["C"], 16, 16), dtype=jnp.float32)

    feats = clip_feature_extractor(x, params, cfg)
    feats = jax.block_until_ready(feats)
    assert feats.shape == (2, cfg["PD"]), feats.shape
    assert jnp.all(jnp.isfinite(feats))
    print("KERNEL_OK")
</pallas_src>

<mosaic_0001>
module attributes {stable_mosaic.version = 11 : i64} {
  func.func @_fused_linear_kernel(%arg0: i32, %arg1: memref<32x192xbf16, #tpu.memory_space<vmem>>, %arg2: memref<192x32xbf16, #tpu.memory_space<vmem>>, %arg3: memref<32x32xbf16, #tpu.memory_space<vmem>>) attributes {dimension_semantics = [#tpu.dimension_semantics<parallel>], iteration_bounds = array<i64: 1>, scalar_prefetch = 0 : i64, scratch_operands = 0 : i64, tpu.core_type = #tpu.core_type<tc>, window_params = [{transform_indices = @transform_0, window_bounds = array<i64: 32, 192>}, {pipeline_mode = #tpu.pipeline_mode<synchronous>, transform_indices = @transform_1, window_bounds = array<i64: 192, 32>}, {transform_indices = @transform_2, window_bounds = array<i64: 32, 32>}]} {
    %c0 = arith.constant 0 : index
    %c0_0 = arith.constant 0 : index
    %0 = vector.load %arg1[%c0, %c0_0] : memref<32x192xbf16, #tpu.memory_space<vmem>>, vector<32x192xbf16>
    %1 = arith.extf %0 : vector<32x192xbf16> to vector<32x192xf32>
    %cst = arith.constant 2.000000e+00 : f32
    %2 = vector.broadcast %cst : f32 to vector<32x192xf32>
    %3 = arith.mulf %1, %2 : vector<32x192xf32>
    %cst_1 = arith.constant 1.000000e+00 : f32
    %4 = vector.broadcast %cst_1 : f32 to vector<32x192xf32>
    %5 = arith.subf %3, %4 : vector<32x192xf32>
    %6 = arith.truncf %5 : vector<32x192xf32> to vector<32x192xbf16>
    %c0_2 = arith.constant 0 : index
    %c0_3 = arith.constant 0 : index
    %7 = vector.load %arg2[%c0_2, %c0_3] : memref<192x32xbf16, #tpu.memory_space<vmem>>, vector<192x32xbf16>
    %cst_4 = arith.constant dense<0.000000e+00> : vector<32x32xf32>
    %8 = tpu.matmul %6, %7, %cst_4 {dimension_numbers = #tpu.dot_dimension_numbers<[1], [0], [0], [1], [0, 0, 1, 1], [], []>} : vector<32x192xbf16>, vector<192x32xbf16>, vector<32x32xf32> -> vector<32x32xf32>
    %9 = arith.truncf %8 : vector<32x32xf32> to vector<32x32xbf16>
    %c0_5 = arith.constant 0 : index
    %c0_6 = arith.constant 0 : index
    %10 = vector.load %arg3[%c0_5, %c0_6] : memref<32x32xbf16, #tpu.memory_space<vmem>>, vector<32x32xbf16>
    tpu.vector_store %arg3[%c0_5, %c0_6], %9 {strides = array<i32>} : memref<32x32xbf16, #tpu.memory_space<vmem>>, vector<32x32xbf16>,
    return
  }
  func.func @transform_0(%arg0: i32) -> (i32, i32) {
    %c0_i32 = arith.constant 0 : i32
    %c0_i32_0 = arith.constant 0 : i32
    return %arg0, %c0_i32 : i32, i32
  }
  func.func @transform_1(%arg0: i32) -> (i32, i32) {
    %c0_i32 = arith.constant 0 : i32
    %c0_i32_0 = arith.constant 0 : i32
    %c0_i32_1 = arith.constant 0 : i32
    return %c0_i32, %c0_i32_0 : i32, i32
  }
  func.func @transform_2(%arg0: i32) -> (i32, i32) {
    %c0_i32 = arith.constant 0 : i32
    %c0_i32_0 = arith.constant 0 : i32
    return %arg0, %c0_i32 : i32, i32
  }
}

</mosaic_0001>

<llo_original>
// kernel: tpu_custom_call.1
$region0: #{tpu_custom_call.1}
  #allocation0 [shape = 'u32[]', space=smem, size = 0x4, offset = 0x4, fixed_abs, tag = 'smem constant byte address 0x4 - core index']
  #allocation1 [shape = 'u32[144,128]{1,0:T(1,128)}', space=vmem, size = 0x12000, scoped, tag = 'internal scratch']
  %s0 = inlined_call_operand.vmem [shape: bf16[32,192], index: 0, kind: input, shape index: {}]
  %s1 = inlined_call_operand.vmem [shape: bf16[192,32], index: 1, kind: input, shape index: {}]
  %s2 = inlined_call_operand.hbm [shape: bf16[32,32], index: 2, kind: output, shape index: {}]
  %s3 = sld [smem:[#allocation0]]
  $region18: #{tpu_custom_call.1} parent=0
    _
  %s5 = ssub.s32 1, %s3
  %s6 = scalar_select 0, %s5, %s3
  $region1: #{tpu_custom_call.1} parent=0
    #allocation2 [shape = 'u8[8192]{0}', space=vmem, size = 0x2000, scoped, tag = 'output window, operand 0, single buffered']
    #allocation3 [shape = 's32[1]{0}', space=sflag, size = 0x4, scoped, tag = 'scoped memory for tpu_custom_call.1']
    %7 = vsyncpa [#allocation3], 0
    // Predicated region
    $region2: #{tpu_custom_call.1} parent=1 // pred_check
      _
    $region3: #{tpu_custom_call.1} parent=1 // pred_check_branch
      %9 = sbr.rel (0) target = $region5
    $region4: #{tpu_custom_call.1} parent=1 // pred_region
      _
    $region5: #{tpu_custom_call.1} parent=1 // pred_fallthru
      _
    // Predicated region
    $region6: #{tpu_custom_call.1} parent=1 // pred_check
      _
    $region7: #{tpu_custom_call.1} parent=1 // pred_check_branch
      %11 = sbr.rel (0) target = $region9
    $region8: #{tpu_custom_call.1} parent=1 // pred_region
      _
    $region9: #{tpu_custom_call.1} parent=1 // pred_fallthru
      _
    %v13 = vld [vmem:[%s0] sm:$0xff]
    %v14 = vld [vmem:[%s0 + $0x8] sm:$0xff]
    %v15 = vld [vmem:[%s0 + $0x10] sm:$0xff]
    %v16 = vld [vmem:[%s0 + $0x18] sm:$0xff]
    %v17 = vunpack.c.l.bf16 %v13
    %v18 = vunpack.c.h.bf16 %v13
    %v19 = vunpack.c.l.bf16 %v14
    %v20 = vunpack.c.h.bf16 %v14
    %v21 = vunpack.c.l.bf16 %v15
    %v22 = vunpack.c.h.bf16 %v15
    %v23 = vunpack.c.l.bf16 %v16
    %v24 = vunpack.c.h.bf16 %v16
    %v25 = vmul.f32 %v17, 2.0
    %v26 = vmul.f32 %v18, 2.0
    %v27 = vmul.f32 %v19, 2.0
    %v28 = vmul.f32 %v20, 2.0
    %v29 = vmul.f32 %v21, 2.0
    %v30 = vmul.f32 %v22, 2.0
    %v31 = vmul.f32 %v23, 2.0
    %v32 = vmul.f32 %v24, 2.0
    %v33 = vsub.f32 %v25, 1.0
    %v34 = vsub.f32 %v26, 1.0
    %v35 = vsub.f32 %v27, 1.0
    %v36 = vsub.f32 %v28, 1.0
    %v37 = vsub.f32 %v29, 1.0
    %v38 = vsub.f32 %v30, 1.0
    %v39 = vsub.f32 %v31, 1.0
    %v40 = vsub.f32 %v32, 1.0
    %v41 = vpack.c.bf16 %v35, %v33
    %v42 = vpack.c.bf16 %v36, %v34
    %v43 = vpack.c.bf16 %v39, %v37
    %v44 = vpack.c.bf16 %v40, %v38
    %v45 = vld [vmem:[%s1] sm:$0xf]
    %v46 = vld [vmem:[%s1 + $0x4] sm:$0xf]
    %v47 = vld [vmem:[%s1 + $0x8] sm:$0xf]
    %v48 = vld [vmem:[%s1 + $0xc] sm:$0xf]
    %v49 = vld [vmem:[%s1 + $0x10] sm:$0xf]
    %v50 = vld [vmem:[%s1 + $0x14] sm:$0xf]
    %v51 = vld [vmem:[%s1 + $0x18] sm:$0xf]
    %v52 = vld [vmem:[%s1 + $0x1c] sm:$0xf]
    %v53 = vld [vmem:[%s1 + $0x20] sm:$0xf]
    %v54 = vld [vmem:[%s1 + $0x24] sm:$0xf]
    %v55 = vld [vmem:[%s1 + $0x28] sm:$0xf]
    %v56 = vld [vmem:[%s1 + $0x2c] sm:$0xf]
    %v57 = vld [vmem:[%s1 + $0x30] sm:$0xf]
    %v58 = vld [vmem:[%s1 + $0x34] sm:$0xf]
    %v59 = vld [vmem:[%s1 + $0x38] sm:$0xf]
    %v60 = vld [vmem:[%s1 + $0x3c] sm:$0xf]
    %v61 = vld [vmem:[%s1 + $0x40] sm:$0xf]
    %v62 = vld [vmem:[%s1 + $0x44] sm:$0xf]
    %v63 = vld [vmem:[%s1 + $0x48] sm:$0xf]
    %v64 = vld [vmem:[%s1 + $0x4c] sm:$0xf]
    %v65 = vld [vmem:[%s1 + $0x50] sm:$0xf]
    %v66 = vld [vmem:[%s1 + $0x54] sm:$0xf]
    %v67 = vld [vmem:[%s1 + $0x58] sm:$0xf]
    %v68 = vld [vmem:[%s1 + $0x5c] sm:$0xf]
    %v93 = vunpack.c.l.b16 %v45
    %v94 = vunpack.c.l.b16 %v46
    %v95 = vunpack.c.l.b16 %v47
    %v96 = vunpack.c.l.b16 %v48
    %v97 = vunpack.c.l.b16 %v49
    %v98 = vunpack.c.l.b16 %v50
    %v99 = vunpack.c.l.b16 %v51
    %v100 = vunpack.c.l.b16 %v52
    %v101 = vunpack.c.l.b16 %v53
    %v102 = vunpack.c.l.b16 %v54
    %v103 = vunpack.c.l.b16 %v55
    %v104 = vunpack.c.l.b16 %v56
    %v105 = vunpack.c.l.b16 %v57
    %v106 = vunpack.c.l.b16 %v58
    %v107 = vunpack.c.l.b16 %v59
    %v108 = vunpack.c.l.b16 %v60
    %v109 = vunpack.c.l.b16 %v61
    %v110 = vunpack.c.l.b16 %v62
    %v111 = vunpack.c.l.b16 %v63
    %v112 = vunpack.c.l.b16 %v64
    %v113 = vunpack.c.l.b16 %v65
    %v114 = vunpack.c.l.b16 %v66
    %v115 = vunpack.c.l.b16 %v67
    %v116 = vunpack.c.l.b16 %v68
    %v117 = vpack.c.b16 %v94, %v93
    %v118 = vpack.c.b16 %v96, %v95
    %v119 = vpack.c.b16 %v98, %v97
    %v120 = vpack.c.b16 %v100, %v99
    %v121 = vpack.c.b16 %v102, %v101
    %v122 = vpack.c.b16 %v104, %v103
    %v123 = vpack.c.b16 %v106, %v105
    %v124 = vpack.c.b16 %v108, %v107
    %v125 = vpack.c.b16 %v110, %v109
    %v126 = vpack.c.b16 %v112, %v111
    %v127 = vpack.c.b16 %v114, %v113
    %v128 = vpack.c.b16 %v116, %v115
    %vm141 = vcmask 523264
    %v143 = vsel %vm141, %v42, 0
    %v146 = vsel %vm141, %v44, 0
    %148 = vmatprep.subr.bf16.mxu0 0
    %149 = vmatpush1.bf16.msra.mxu0 %v117
    %150 = vmatprep.subr.bf16.mxu0 0
    %151 = vmatpush1.bf16.msra.mxu0 %v118
    %152 = vmatprep.subr.bf16.mxu0 0
    %153 = vmatpush1.bf16.msra.mxu0 %v119
    %154 = vmatprep.subr.bf16.mxu0 0
    %155 = vmatpush1.bf16.msra.mxu0 %v120
    %156 = vmatprep.subr.bf16.mxu0 0
    %157 = vmatpush1.bf16.msra.mxu0 %v121
    %158 = vmatprep.subr.bf16.mxu0 0
    %159 = vmatpush1.bf16.msra.mxu0 %v122
    %160 = vmatprep.subr.bf16.mxu0 0
    %161 = vmatpush1.bf16.msra.mxu0 %v123
    %162 = vmatprep.subr.bf16.mxu0 0
    %163 = vmatpush1.bf16.msra.mxu0 %v124
    %164 = vmatprep.subr.bf16.mxu0 0
    %165 = vmatpush1.bf16.msra.mxu0 %v125
    %166 = vmatprep.subr.bf16.mxu0 0
    %167 = vmatpush1.bf16.msra.mxu0 %v126
    %168 = vmatprep.subr.bf16.mxu0 0
    %169 = vmatpush1.bf16.msra.mxu0 %v127
    %170 = vmatprep.subr.bf16.mxu0 0
    %171 = vmatpush1.bf16.msra.mxu0 %v128
    %172 = vmatprep.subr.bf16.mxu0 0
    %173 = vmatpush1.bf16.msra.mxu0 0
    %174 = vmatprep.subr.bf16.mxu0 0
    %175 = vmatpush1.bf16.msra.mxu0 0
    %176 = vmatprep.subr.bf16.mxu0 0
    %177 = vmatpush1.bf16.msra.mxu0 0
    %178 = vmatprep.subr.bf16.mxu0 0
    %179 = vmatpush1.bf16.msra.mxu0 0
    %180 = vmatprep.mubr.bf16.mxu0 %v143
    %181 = vmatmul.mubr.bf16.gmra.mrb[0].mxu0 %v41
    %v182 = vpop.f32.mrb[0].mxu0
    %v183 = vadd.f32 0.0, %v182
    %v184 = vpop.f32.mrb[0].mxu0
    %v185 = vpop.f32.mrb[0].mxu0
    %v186 = vadd.f32 0.0, %v185
    %v187 = vpop.f32.mrb[0].mxu0
    %188 = vmatprep.mubr.bf16.mxu0 %v146
    %189 = vmatmul.mubr.bf16.gmra.mrb[0].mxu0 %v43
    %v190 = vpop.f32.mrb[0].mxu0
    %v191 = vadd.f32 0.0, %v190
    %v192 = vpop.f32.mrb[0].mxu0
    %v193 = vpop.f32.mrb[0].mxu0
    %v194 = vadd.f32 0.0, %v193
    %v195 = vpop.f32.mrb[0].mxu0
    %196 = vdwg.mxu0
    %v197 = vpack.c.bf16 %v186, %v183
    %v198 = vpack.c.bf16 %v194, %v191
    %v201 = vunpack.c.l.b16 %v197
    %v202 = vunpack.c.h.b16 %v197
    %v203 = vunpack.c.l.b16 %v198
    %v204 = vunpack.c.h.b16 %v198
    %v205 = vpack.c.b16 %v201, %v201
    %v206 = vpack.c.b16 %v202, %v202
    %v207 = vpack.c.b16 %v203, %v203
    %v208 = vpack.c.b16 %v204, %v204
    %vm213 = vcmask 257024
    %214 = vst.msk [vmem:[#allocation2] sm:$0xf] %vm213, %v205
    %215 = vst.msk [vmem:[#allocation2 + $0x4] sm:$0xf] %vm213, %v206
    %216 = vst.msk [vmem:[#allocation2 + $0x8] sm:$0xf] %vm213, %v207
    %217 = vst.msk [vmem:[#allocation2 + $0xc] sm:$0xf] %vm213, %v208
    // Predicated region
    $region10: #{tpu_custom_call.1} parent=1 // pred_check
      _
    $region11: #{tpu_custom_call.1} parent=1 // pred_check_branch
      %219 = sbr.rel (0) target = $region13
    $region12: #{tpu_custom_call.1} parent=1 // pred_region
      %s221 = ssub.s32 256, 256
      %222 = vsyncadd [#allocation3], %s221
      %s223 = sshll.u32 [#allocation2], 4
      %s224 = int_to_ptr.vmem [resolvable:$true] %s223
      %229 = dma.vmem_to_hbm [thread:$0]  %s224, 256, %s2, [#allocation3], 64, 64, 4
    $region13: #{tpu_custom_call.1} parent=1 // pred_fallthru
      _
    // Predicated region
    $region14: #{tpu_custom_call.1} parent=1 // pred_check
      _
    $region15: #{tpu_custom_call.1} parent=1 // pred_check_branch
      %231 = sbr.rel (0) target = $region17
    $region16: #{tpu_custom_call.1} parent=1 // pred_region
      %232 = dma.done [#allocation3], 256
    $region17: #{tpu_custom_call.1} parent=1 // pred_fallthru
      _
    %233 = vsyncpa [#allocation3], 1

</llo_original>
